<compile_context>
chip_gen: v7x
topology: tpu7x:2x2x1
jax: 0.10.0
libtpu: 0.0.40
codegen_flags: <defaults>
</compile_context>

<pallas_src>
import jax
import jax.numpy as jnp
import numpy as np
from jax.experimental import pallas as pl
from jax.experimental.pallas import tpu as pltpu


def _outconv_kernel(x_ref, w_ref, b_ref, o_ref):
    """One (batch, spatial-tile) step of the 1x1x1 conv.

    x_ref: [Cin, TS]   (channels on sublanes, spatial on lanes)
    w_ref: [Cout, Cin] (resident across the whole grid)
    b_ref: [Cout, 1]
    o_ref: [Cout, TS]
    """
    y = jnp.dot(w_ref[...], x_ref[...], preferred_element_type=jnp.float32)
    o_ref[...] = (y + b_ref[...]).astype(o_ref.dtype)


def _pick_spatial_tile(s, cin, cout, n, dtype_bytes=4,
                       tile_budget_bytes=12 * 1024 * 1024):
    """VMEM-budgeted, lane-aligned spatial tile.

    Sizes TS so 2 (double buffer) x (Cin + Cout) x TS x dtype_bytes stays around
    `tile_budget_bytes` (comfortably inside v7x's 32 MiB scoped VMEM and v5e's
    16 MiB default), keeping TS a multiple of 128 and, when S is 128-aligned, a
    divisor of S so there is no ragged (masked-store) tail tile.
    """
    if s <= 128:
        return s                                    # one full-extent tile
    per_lane = 2 * (cin + cout) * dtype_bytes       # double-buffered in + out
    ts = max(128, (tile_budget_bytes // per_lane) // 128 * 128)
    ts = min(ts, (s // 128) * 128)
    if s % 128 == 0:
        while s % ts:                                # largest 128-multiple divisor
            ts -= 128
        if n == 1 and ts == s and s >= 256:          # keep >=2 tiles for megacore
            ts = max(128, (s // 2) // 128 * 128)
            while s % ts:
                ts -= 128
    return ts


@jax.jit
def outconv_forward(x_ncdhw, weight, bias):
    """Forward of OutConv. Input/output are NCDHW like the PyTorch module.

    weight: [Cout, Cin, 1, 1, 1] (PyTorch Conv3d layout), bias: [Cout].
    """
    n, cin, d, h, wsp = x_ncdhw.shape
    cout = weight.shape[0]
    s = d * h * wsp
    itemsize = jnp.dtype(x_ncdhw.dtype).itemsize

    w2d = weight.reshape(cout, cin)                  # [Cout, Cin]
    b2d = bias.reshape(cout, 1)                      # [Cout, 1]
    x3 = x_ncdhw.reshape(n, cin, s)                  # free reshape, no transpose

    ts = _pick_spatial_tile(s, cin, cout, n, dtype_bytes=itemsize)
    num_spatial = pl.cdiv(s, ts)

    cost = pl.CostEstimate(
        flops=2 * n * s * cin * cout,
        transcendentals=0,
        bytes_accessed=itemsize * (n * cin * s + cin * cout + cout
                                   + n * cout * s),
    )

    y = pl.pallas_call(
        _outconv_kernel,
        out_shape=jax.ShapeDtypeStruct((n, cout, s), x_ncdhw.dtype),
        grid=(n, num_spatial),
        in_specs=[
            # activation tile: batch squeezed, channels on sublanes, spatial on lanes
            pl.BlockSpec((None, cin, ts), lambda ni, si: (ni, 0, si)),
            # weight / bias stay resident across the whole grid
            pl.BlockSpec((cout, cin), lambda ni, si: (0, 0)),
            pl.BlockSpec((cout, 1), lambda ni, si: (0, 0)),
        ],
        out_specs=pl.BlockSpec((None, cout, ts), lambda ni, si: (ni, 0, si)),
        compiler_params=pltpu.CompilerParams(
            dimension_semantics=("parallel", "parallel"),
            vmem_limit_bytes=32 * 1024 * 1024,
        ),
        cost_estimate=cost,
    )(x3, w2d, b2d)

    return y.reshape(n, cout, d, h, wsp)


def _reference_forward(x, weight, bias):
    """Pure-JAX reference (lax conv) used only to verify the Pallas path."""
    y = jax.lax.conv_general_dilated(
        x, weight, window_strides=(1, 1, 1), padding="VALID",
        dimension_numbers=("NCDHW", "OIDHW", "NCDHW"))
    return y + bias.reshape(1, -1, 1, 1, 1)


def _run_case(key, n, cin, cout, d, h, w):
    kx, kw, kb = jax.random.split(key, 3)
    x = jax.random.normal(kx, (n, cin, d, h, w), jnp.float32)
    weight = 0.1 * jax.random.normal(kw, (cout, cin, 1, 1, 1), jnp.float32)
    bias = 0.1 * jax.random.normal(kb, (cout,), jnp.float32)

    out = jax.block_until_ready(outconv_forward(x, weight, bias))
    assert out.shape == (n, cout, d, h, w), out.shape

    ref = _reference_forward(x, weight, bias)
    np.testing.assert_allclose(np.asarray(out), np.asarray(ref),
                               rtol=1e-4, atol=1e-4)


if __name__ == "__main__":
    key = jax.random.PRNGKey(0)
    k1, k2 = jax.random.split(key)

    # Tile-divisible spatial volume (S = 512, single lane-dense tile per batch).
    _run_case(k1, n=2, cin=4, cout=8, d=8, h=8, w=8)
    # Ragged spatial volume (S = 693, exercises the masked tail-tile path).
    _run_case(k2, n=1, cin=3, cout=2, d=7, h=9, w=11)

    print("KERNEL_OK")
</pallas_src>

<mosaic_0001>
module attributes {stable_mosaic.version = 11 : i64} {
  func.func @_outconv_kernel(%arg0: i32, %arg1: i32, %arg2: memref<1x4x512xf32, #tpu.memory_space<vmem>>, %arg3: memref<8x4xf32, #tpu.memory_space<vmem>>, %arg4: memref<8x1xf32, #tpu.memory_space<vmem>>, %arg5: memref<1x8x512xf32, #tpu.memory_space<vmem>>) attributes {dimension_semantics = [#tpu.dimension_semantics<parallel>, #tpu.dimension_semantics<parallel>], iteration_bounds = array<i64: 2, 1>, scalar_prefetch = 0 : i64, scratch_operands = 0 : i64, tpu.core_type = #tpu.core_type<tc>, window_params = [{transform_indices = @transform_0, window_bounds = array<i64: 1, 4, 512>}, {pipeline_mode = #tpu.pipeline_mode<synchronous>, transform_indices = @transform_1, window_bounds = array<i64: 8, 4>}, {pipeline_mode = #tpu.pipeline_mode<synchronous>, transform_indices = @transform_2, window_bounds = array<i64: 8, 1>}, {transform_indices = @transform_3, window_bounds = array<i64: 1, 8, 512>}]} {
    %c0 = arith.constant 0 : index
    %c0_0 = arith.constant 0 : index
    %0 = vector.load %arg3[%c0, %c0_0] : memref<8x4xf32, #tpu.memory_space<vmem>>, vector<8x4xf32>
    %c0_1 = arith.constant 0 : index
    %c0_2 = arith.constant 0 : index
    %c0_3 = arith.constant 0 : index
    %1 = vector.load %arg2[%c0_1, %c0_2, %c0_3] : memref<1x4x512xf32, #tpu.memory_space<vmem>>, vector<1x4x512xf32>
    %2 = vector.shape_cast %1 : vector<1x4x512xf32> to vector<4x512xf32>
    %cst = arith.constant dense<0.000000e+00> : vector<8x512xf32>
    %3 = tpu.matmul %0, %2, %cst {dimension_numbers = #tpu.dot_dimension_numbers<[1], [0], [0], [1], [0, 0, 1, 1], [], []>} : vector<8x4xf32>, vector<4x512xf32>, vector<8x512xf32> -> vector<8x512xf32>
    %c0_4 = arith.constant 0 : index
    %c0_5 = arith.constant 0 : index
    %4 = vector.load %arg4[%c0_4, %c0_5] : memref<8x1xf32, #tpu.memory_space<vmem>>, vector<8x1xf32>
    %5 = vector.broadcast %4 : vector<8x1xf32> to vector<8x512xf32>
    %6 = arith.addf %3, %5 : vector<8x512xf32>
    %c0_6 = arith.constant 0 : index
    %c0_7 = arith.constant 0 : index
    %c0_8 = arith.constant 0 : index
    %7 = vector.load %arg5[%c0_6, %c0_7, %c0_8] : memref<1x8x512xf32, #tpu.memory_space<vmem>>, vector<1x8x512xf32>
    %8 = vector.shape_cast %7 : vector<1x8x512xf32> to vector<8x512xf32>
    %9 = vector.shape_cast %6 : vector<8x512xf32> to vector<1x8x512xf32>
    tpu.vector_store %arg5[%c0_6, %c0_7, %c0_8], %9 {strides = array<i32>} : memref<1x8x512xf32, #tpu.memory_space<vmem>>, vector<1x8x512xf32>,
    return
  }
  func.func @transform_0(%arg0: i32, %arg1: i32) -> (i32, i32, i32) {
    %c0_i32 = arith.constant 0 : i32
    %c0_i32_0 = arith.constant 0 : i32
    return %arg0, %c0_i32, %arg1 : i32, i32, i32
  }
  func.func @transform_1(%arg0: i32, %arg1: i32) -> (i32, i32) {
    %c0_i32 = arith.constant 0 : i32
    %c0_i32_0 = arith.constant 0 : i32
    %c0_i32_1 = arith.constant 0 : i32
    return %c0_i32, %c0_i32_0 : i32, i32
  }
  func.func @transform_2(%arg0: i32, %arg1: i32) -> (i32, i32) {
    %c0_i32 = arith.constant 0 : i32
    %c0_i32_0 = arith.constant 0 : i32
    %c0_i32_1 = arith.constant 0 : i32
    return %c0_i32, %c0_i32_0 : i32, i32
  }
  func.func @transform_3(%arg0: i32, %arg1: i32) -> (i32, i32, i32) {
    %c0_i32 = arith.constant 0 : i32
    %c0_i32_0 = arith.constant 0 : i32
    return %arg0, %c0_i32, %arg1 : i32, i32, i32
  }
}

</mosaic_0001>

<llo_original>
// kernel: outconv_forward.1
$region0: #{outconv_forward.1}
  #allocation0 [shape = 'u32[]', space=smem, size = 0x4, offset = 0x4, fixed_abs, tag = 'smem constant byte address 0x4 - core index']
  #allocation1 [shape = 'u32[144,128]{1,0:T(1,128)}', space=vmem, size = 0x12000, scoped, tag = 'internal scratch']
  %s0 = inlined_call_operand.vmem [shape: f32[2,4,512], index: 0, kind: input, shape index: {}]
  %s1 = inlined_call_operand.vmem [shape: f32[8,4], index: 1, kind: input, shape index: {}]
  %s2 = inlined_call_operand.vmem [shape: f32[8,1], index: 2, kind: input, shape index: {}]
  %s3 = inlined_call_operand.vmem [shape: f32[2,8,512], index: 3, kind: output, shape index: {}]
  %s4 = sld [smem:[#allocation0]]
  $region45: #{outconv_forward.1} parent=0
    _
  %s6 = ssub.s32 1, %s4
  %s7 = scalar_select 0, %s6, %s4
  loop: start=0, step=1, limit=4
  $region2: #{outconv_forward.1} parent=0 // loop_pre_header
    _
  $region3: #{outconv_forward.1} parent=0 // loop_header
    %s9 = sphi 0, %s13
    %p10 = scmp.ge.s32.totalorder %s9, 4
    %s16 = sphi 0, %s28
    %s17 = sphi 0, %s24
    %s18 = sphi 0, %s16
    %s19 = sphi 0, %s17
    %s20 = sphi 0, %s18
    %s21 = sphi 0, %s19
    %s33 = sphi 0, %s35
    %s36 = sphi 0, %s33
    %s37 = sphi 0, %s36
    %s53 = sphi 0, %s37
    %s57 = sphi 0, %s57
    %s59 = sphi 0, %s57
    %s60 = sphi 0, %s59
    %s74 = sphi 0, %s60
    %s78 = sphi 0, %s78
    %s80 = sphi 0, %s78
    %s81 = sphi 0, %s80
    %s95 = sphi 0, %s81
    %s103 = sphi 0, %s105
    %s106 = sphi 0, %s103
    %s107 = sphi 0, %s106
    %s123 = sphi 0, %s107
  $region4: #{outconv_forward.1} parent=0 // loop_header_branch
    %12 = sbr.rel (%p10) target = $region8
  $region5: #{outconv_forward.1} parent=0 // loop_body
    %s14 = ssub.s32 %s9, 1
    %s15 = ssub.s32 %s9, 2
    %s22 = sadd.s32 1, %s17
    %p23 = scmp.ge.s32.totalorder %s22, 1
    %s24 = scalar_select %p23, 0, %s22
    %s25 = sadd.s32 1, %s16
    %s26 = scalar_select %p23, %s25, %s16
    %p27 = scmp.ge.s32.totalorder %s26, 2
    %s28 = scalar_select %p27, 0, %s26
    %s29 = ssub.s32 %s16, %s28
    %s30 = ssub.s32 %s17, %s24
    %s31 = sor.u32 %s29, %s30
    %p32 = scmp.eq.s32.totalorder %s31, 0
    %s34 = sadd.s32 %s33, 1
    %s35 = scalar_select %p32, %s33, %s34
    %p38 = pneg %p32
    %p39 = scmp.eq.s32.totalorder %s9, 1
    %p40 = por %p38, %p39
    %p41 = scmp.ne.s32.totalorder %s33, %s36
    %p42 = scmp.eq.s32.totalorder %s9, 0
    %p43 = por %p41, %p42
    %p44 = scmp.ne.s32.totalorder %s33, %s36
    %p45 = scmp.eq.s32.totalorder %s14, 1
    %p46 = por %p44, %p45
    %p47 = scmp.ne.s32.totalorder %s36, %s37
    %p48 = scmp.eq.s32.totalorder %s14, 0
    %p49 = por %p47, %p48
    %p50 = scmp.ne.s32.totalorder %s36, %s37
    %p51 = scmp.eq.s32.totalorder %s15, 1
    %p52 = por %p50, %p51
    %p54 = scmp.ne.s32.totalorder %s37, %s53
    %p55 = scmp.eq.s32.totalorder %s15, 0
    %p56 = por %p54, %p55
    %s58 = sadd.s32 %s57, 1
    %p61 = scmp.eq.s32.totalorder %s9, 1
    %p62 = scmp.ne.s32.totalorder %s57, %s59
    %p63 = scmp.eq.s32.totalorder %s9, 0
    %p64 = por %p62, %p63
    %p65 = scmp.ne.s32.totalorder %s57, %s59
    %p66 = scmp.eq.s32.totalorder %s14, 1
    %p67 = por %p65, %p66
    %p68 = scmp.ne.s32.totalorder %s59, %s60
    %p69 = scmp.eq.s32.totalorder %s14, 0
    %p70 = por %p68, %p69
    %p71 = scmp.ne.s32.totalorder %s59, %s60
    %p72 = scmp.eq.s32.totalorder %s15, 1
    %p73 = por %p71, %p72
    %p75 = scmp.ne.s32.totalorder %s60, %s74
    %p76 = scmp.eq.s32.totalorder %s15, 0
    %p77 = por %p75, %p76
    %s79 = sadd.s32 %s78, 1
    %p82 = scmp.eq.s32.totalorder %s9, 1
    %p83 = scmp.ne.s32.totalorder %s78, %s80
    %p84 = scmp.eq.s32.totalorder %s9, 0
    %p85 = por %p83, %p84
    %p86 = scmp.ne.s32.totalorder %s78, %s80
    %p87 = scmp.eq.s32.totalorder %s14, 1
    %p88 = por %p86, %p87
    %p89 = scmp.ne.s32.totalorder %s80, %s81
    %p90 = scmp.eq.s32.totalorder %s14, 0
    %p91 = por %p89, %p90
    %p92 = scmp.ne.s32.totalorder %s80, %s81
    %p93 = scmp.eq.s32.totalorder %s15, 1
    %p94 = por %p92, %p93
    %p96 = scmp.ne.s32.totalorder %s81, %s95
    %p97 = scmp.eq.s32.totalorder %s15, 0
    %p98 = por %p96, %p97
    %s99 = ssub.s32 %s16, %s28
    %s100 = ssub.s32 %s17, %s24
    %s101 = sor.u32 %s99, %s100
    %p102 = scmp.eq.s32.totalorder %s101, 0
    %s104 = sadd.s32 %s103, 1
    %s105 = scalar_select %p102, %s103, %s104
    %p108 = pneg %p102
    %p109 = scmp.eq.s32.totalorder %s9, 1
    %p110 = por %p108, %p109
    %p111 = scmp.ne.s32.totalorder %s103, %s106
    %p112 = scmp.eq.s32.totalorder %s9, 0
    %p113 = por %p111, %p112
    %p114 = scmp.ne.s32.totalorder %s103, %s106
    %p115 = scmp.eq.s32.totalorder %s14, 1
    %p116 = por %p114, %p115
    %p117 = scmp.ne.s32.totalorder %s106, %s107
    %p118 = scmp.eq.s32.totalorder %s14, 0
    %p119 = por %p117, %p118
    %p120 = scmp.ne.s32.totalorder %s106, %s107
    %p121 = scmp.eq.s32.totalorder %s15, 1
    %p122 = por %p120, %p121
    %p124 = scmp.ne.s32.totalorder %s107, %s123
    %p125 = scmp.eq.s32.totalorder %s15, 0
    %p126 = por %p124, %p125
    %p127 = scmp.le.s32.totalorder 1, %s9
    %p128 = scmp.lt.s32.totalorder %s9, 3
    %p129 = pnand %p127, %p128
    %p130 = pneg %p129
    // Predicated region
    $region9: #{outconv_forward.1} parent=5 // pred_check
      _
    $region10: #{outconv_forward.1} parent=5 // pred_check_branch
      %132 = sbr.rel (%p129) target = $region12
    $region11: #{outconv_forward.1} parent=5 // pred_region
      %s133 = ssub.s32 %s9, 1
      // Predicated region
      $region13: #{outconv_forward.1} parent=11 // pred_check
        %p134 = pneg %p70
      $region14: #{outconv_forward.1} parent=11 // pred_check_branch
        %136 = sbr.rel (%p134) target = $region16
      $region15: #{outconv_forward.1} parent=11 // pred_region
        _
      $region16: #{outconv_forward.1} parent=11 // pred_fallthru
        _
      // Predicated region
      $region17: #{outconv_forward.1} parent=11 // pred_check
        %p137 = pneg %p91
      $region18: #{outconv_forward.1} parent=11 // pred_check_branch
        %139 = sbr.rel (%p137) target = $region20
      $region19: #{outconv_forward.1} parent=11 // pred_region
        _
      $region20: #{outconv_forward.1} parent=11 // pred_fallthru
        _
    $region12: #{outconv_forward.1} parent=5 // pred_fallthru
      _
    %p140 = scmp.lt.s32.totalorder %s9, 2
    // Predicated region
    $region21: #{outconv_forward.1} parent=5 // pred_check
      %p141 = pneg %p140
    $region22: #{outconv_forward.1} parent=5 // pred_check_branch
      %143 = sbr.rel (%p141) target = $region24
    $region23: #{outconv_forward.1} parent=5 // pred_region
      // Predicated region
      $region25: #{outconv_forward.1} parent=23 // pred_check
        %p144 = pneg %p43
      $region26: #{outconv_forward.1} parent=23 // pred_check_branch
        %146 = sbr.rel (%p144) target = $region28
      $region27: #{outconv_forward.1} parent=23 // pred_region
        %s147 = smul.u32 4, %s17
        %p148 = scmp.lt.s32.totalorder %s16, 1
        %s149 = scalar_select %p148, %s16, 1
        %p150 = scmp.lt.s32.totalorder %s147, 3
        %s151 = scalar_select %p150, %s147, 3
        %s152 = smul.addr %s149, 4
        %s153 = sadd.s32 %s151, %s152
        %s154 = smul.addr %s153, 4
        %s155 = scalar_lea.vmem %s0, %s154
        %s156 = smul.u32 4, %s17
      $region28: #{outconv_forward.1} parent=23 // pred_fallthru
        _
    $region24: #{outconv_forward.1} parent=5 // pred_fallthru
      _
    %p157 = scmp.le.s32.totalorder 1, %s9
    %p158 = scmp.lt.s32.totalorder %s9, 3
    %p159 = pnand %p157, %p158
    %p160 = pneg %p159
    // Predicated region
    $region29: #{outconv_forward.1} parent=5 // pred_check
      _
    $region30: #{outconv_forward.1} parent=5 // pred_check_branch
      %162 = sbr.rel (%p159) target = $region32
    $region31: #{outconv_forward.1} parent=5 // pred_region
      %s163 = ssub.s32 %s9, 1
      %s164 = smul.u32 4, %s19
      %p165 = scmp.lt.s32.totalorder %s18, 1
      %s166 = scalar_select %p165, %s18, 1
      %p167 = scmp.lt.s32.totalorder %s164, 3
      %s168 = scalar_select %p167, %s164, 3
      %s169 = smul.addr %s166, 4
      %s170 = sadd.s32 %s168, %s169
      %s171 = smul.addr %s170, 4
      %s172 = scalar_lea.vmem %s0, %s171
      %p173 = pneg %p49
      %p174 = pneg %p46
      %p175 = pneg %p70
      %p176 = pneg %p67
      %p177 = pneg %p91
      %p178 = pneg %p88
      %p179 = pneg %p119
      %p180 = pneg %p116
      %s181 = smul.u32 4, %s19
      %p182 = scmp.lt.s32.totalorder %s18, 1
      %s183 = scalar_select %p182, %s18, 1
      %p184 = scmp.lt.s32.totalorder %s181, 3
      %s185 = scalar_select %p184, %s181, 3
      %s186 = smul.addr %s183, 4
      %s187 = sadd.s32 %s185, %s186
      %s188 = smul.addr %s187, 8
      %s189 = scalar_lea.vmem %s3, %s188
      %s190 = smul.u32 4, %s19
      %p191 = scmp.lt.s32.totalorder %s18, 1
      %s192 = scalar_select %p191, %s18, 1
      %p193 = scmp.lt.s32.totalorder %s190, 3
      %s194 = scalar_select %p193, %s190, 3
      %s195 = smul.addr %s192, 4
      %s196 = sadd.s32 %s194, %s195
      %s197 = smul.addr %s196, 4
      %s198 = scalar_lea.vmem %s0, %s197
      %s199 = smul.u32 4, %s19
      %s200 = smul.u32 4, %s19
      %p201 = scmp.lt.s32.totalorder %s18, 1
      %s202 = scalar_select %p201, %s18, 1
      %p203 = scmp.lt.s32.totalorder %s200, 3
      %s204 = scalar_select %p203, %s200, 3
      %s205 = smul.addr %s202, 4
      %s206 = sadd.s32 %s204, %s205
      %s207 = smul.addr %s206, 8
      %s208 = scalar_lea.vmem %s3, %s207
      %s209 = smul.u32 4, %s19
      %v210 = vld [vmem:[%s1] sm:$0xff]
      %v211 = vld [vmem:[%s198] sm:$0xff]
      %v212 = vld [vmem:[%s198 + $0x8] sm:$0xff]
      %v213 = vld [vmem:[%s2] sm:$0xff]
      %215 = vset.pattern.permute.xlu0 0
      %216 = vperm.xlu0 %215, %v213
      %v217 = vpop.permute.xlu0 %216
      %v221 = vcombine.high %v211, %v211
      %v222 = vcombine.high %v212, %v212
      %vm223 = vcmask 31744
      %v225 = vsel %vm223, %v210, 0
      %vm227 = vcmask 1043456
      %v228 = vsel %vm227, %v211, 0
      %v230 = vsel %vm227, %v221, 0
      %v232 = vsel %vm227, %v212, 0
      %v234 = vsel %vm227, %v222, 0
      %236 = vmatprep.subr.mxu0 %v230
      %237 = vmatpush1.msra.mxu0 %v228
      %238 = vmatprep.subr.mxu0 0.0
      %239 = vmatpush1.msra.mxu0 0.0
      %240 = vmatprep.subr.mxu0 0.0
      %241 = vmatpush1.msra.mxu0 0.0
      %242 = vmatprep.subr.mxu0 0.0
      %243 = vmatpush1.msra.mxu0 0.0
      %244 = vmatprep.subr.mxu0 0.0
      %245 = vmatpush1.msra.mxu0 0.0
      %246 = vmatprep.subr.mxu0 0.0
      %247 = vmatpush1.msra.mxu0 0.0
      %248 = vmatprep.subr.mxu0 0.0
      %249 = vmatpush1.msra.mxu0 0.0
      %250 = vmatprep.subr.mxu0 0.0
      %251 = vmatpush1.msra.mxu0 0.0
      %252 = vmatprep.subr.mxu0 0.0
      %253 = vmatpush1.msra.mxu0 0.0
      %254 = vmatprep.subr.mxu0 0.0
      %255 = vmatpush1.msra.mxu0 0.0
      %256 = vmatprep.subr.mxu0 0.0
      %257 = vmatpush1.msra.mxu0 0.0
      %258 = vmatprep.subr.mxu0 0.0
      %259 = vmatpush1.msra.mxu0 0.0
      %260 = vmatprep.subr.mxu0 0.0
      %261 = vmatpush1.msra.mxu0 0.0
      %262 = vmatprep.subr.mxu0 0.0
      %263 = vmatpush1.msra.mxu0 0.0
      %264 = vmatprep.subr.mxu0 0.0
      %265 = vmatpush1.msra.mxu0 0.0
      %266 = vmatprep.subr.mxu0 0.0
      %267 = vmatpush1.msra.mxu0 0.0
      %268 = vmatprep.subr.mxu0 0.0
      %269 = vmatpush1.msra.mxu0 0.0
      %270 = vmatprep.subr.mxu0 0.0
      %271 = vmatpush1.msra.mxu0 0.0
      %272 = vmatprep.subr.mxu0 0.0
      %273 = vmatpush1.msra.mxu0 0.0
      %274 = vmatprep.subr.mxu0 0.0
      %275 = vmatpush1.msra.mxu0 0.0
      %276 = vmatprep.subr.mxu0 0.0
      %277 = vmatpush1.msra.mxu0 0.0
      %278 = vmatprep.subr.mxu0 0.0
      %279 = vmatpush1.msra.mxu0 0.0
      %280 = vmatprep.subr.mxu0 0.0
      %281 = vmatpush1.msra.mxu0 0.0
      %282 = vmatprep.subr.mxu0 0.0
      %283 = vmatpush1.msra.mxu0 0.0
      %284 = vmatprep.subr.mxu0 0.0
      %285 = vmatpush1.msra.mxu0 0.0
      %286 = vmatprep.subr.mxu0 0.0
      %287 = vmatpush1.msra.mxu0 0.0
      %288 = vmatprep.subr.mxu0 0.0
      %289 = vmatpush1.msra.mxu0 0.0
      %290 = vmatprep.subr.mxu0 0.0
      %291 = vmatpush1.msra.mxu0 0.0
      %292 = vmatprep.subr.mxu0 0.0
      %293 = vmatpush1.msra.mxu0 0.0
      %294 = vmatprep.subr.mxu0 0.0
      %295 = vmatpush1.msra.mxu0 0.0
      %296 = vmatprep.subr.mxu0 0.0
      %297 = vmatpush1.msra.mxu0 0.0
      %298 = vmatprep.subr.mxu0 0.0
      %299 = vmatpush1.msra.mxu0 0.0
      %300 = vmatprep.mubr.f32.mxu0 0.0
      %301 = vmatmul.mubr.f32.gmra.mrb[0].mxu0 %v225
      %v302 = vpop.f32.mrb[0].mxu0
      %v303 = vadd.f32 %v217, %v302
      %v304 = vpop.f32.mrb[0].mxu0
      %v305 = vadd.f32 %v217, %v304
      %306 = vdwg.mxu0
      %307 = vmatprep.subr.mxu0 %v234
      %308 = vmatpush1.msra.mxu0 %v232
      %309 = vmatprep.subr.mxu0 0.0
      %310 = vmatpush1.msra.mxu0 0.0
      %311 = vmatprep.subr.mxu0 0.0
      %312 = vmatpush1.msra.mxu0 0.0
      %313 = vmatprep.subr.mxu0 0.0
      %314 = vmatpush1.msra.mxu0 0.0
      %315 = vmatprep.subr.mxu0 0.0
      %316 = vmatpush1.msra.mxu0 0.0
      %317 = vmatprep.subr.mxu0 0.0
      %318 = vmatpush1.msra.mxu0 0.0
      %319 = vmatprep.subr.mxu0 0.0
      %320 = vmatpush1.msra.mxu0 0.0
      %321 = vmatprep.subr.mxu0 0.0
      %322 = vmatpush1.msra.mxu0 0.0
      %323 = vmatprep.subr.mxu0 0.0
      %324 = vmatpush1.msra.mxu0 0.0
      %325 = vmatprep.subr.mxu0 0.0
      %326 = vmatpush1.msra.mxu0 0.0
      %327 = vmatprep.subr.mxu0 0.0
      %328 = vmatpush1.msra.mxu0 0.0
      %329 = vmatprep.subr.mxu0 0.0
      %330 = vmatpush1.msra.mxu0 0.0
      %331 = vmatprep.subr.mxu0 0.0
      %332 = vmatpush1.msra.mxu0 0.0
      %333 = vmatprep.subr.mxu0 0.0
      %334 = vmatpush1.msra.mxu0 0.0
      %335 = vmatprep.subr.mxu0 0.0
      %336 = vmatpush1.msra.mxu0 0.0
      %337 = vmatprep.subr.mxu0 0.0
      %338 = vmatpush1.msra.mxu0 0.0
      %339 = vmatprep.subr.mxu0 0.0
      %340 = vmatpush1.msra.mxu0 0.0
      %341 = vmatprep.subr.mxu0 0.0
      %342 = vmatpush1.msra.mxu0 0.0
      %343 = vmatprep.subr.mxu0 0.0
      %344 = vmatpush1.msra.mxu0 0.0
      %345 = vmatprep.subr.mxu0 0.0
      %346 = vmatpush1.msra.mxu0 0.0
      %347 = vmatprep.subr.mxu0 0.0
      %348 = vmatpush1.msra.mxu0 0.0
      %349 = vmatprep.subr.mxu0 0.0
      %350 = vmatpush1.msra.mxu0 0.0
      %351 = vmatprep.subr.mxu0 0.0
      %352 = vmatpush1.msra.mxu0 0.0
      %353 = vmatprep.subr.mxu0 0.0
      %354 = vmatpush1.msra.mxu0 0.0
      %355 = vmatprep.subr.mxu0 0.0
      %356 = vmatpush1.msra.mxu0 0.0
      %357 = vmatprep.subr.mxu0 0.0
      %358 = vmatpush1.msra.mxu0 0.0
      %359 = vmatprep.subr.mxu0 0.0
      %360 = vmatpush1.msra.mxu0 0.0
      %361 = vmatprep.subr.mxu0 0.0
      %362 = vmatpush1.msra.mxu0 0.0
      %363 = vmatprep.subr.mxu0 0.0
      %364 = vmatpush1.msra.mxu0 0.0
      %365 = vmatprep.subr.mxu0 0.0
      %366 = vmatpush1.msra.mxu0 0.0
      %367 = vmatprep.subr.mxu0 0.0
      %368 = vmatpush1.msra.mxu0 0.0
      %369 = vmatprep.subr.mxu0 0.0
      %370 = vmatpush1.msra.mxu0 0.0
      %371 = vmatprep.mubr.f32.mxu0 0.0
      %372 = vmatmul.mubr.f32.gmra.mrb[0].mxu0 %v225
      %v373 = vpop.f32.mrb[0].mxu0
      %v374 = vadd.f32 %v217, %v373
      %v375 = vpop.f32.mrb[0].mxu0
      %v376 = vadd.f32 %v217, %v375
      %377 = vdwg.mxu0
      %378 = vst [vmem:[%s208] sm:$0xff] %v303
      %379 = vst [vmem:[%s208 + $0x8] sm:$0xff] %v305
      %380 = vst [vmem:[%s208 + $0x10] sm:$0xff] %v374
      %381 = vst [vmem:[%s208 + $0x18] sm:$0xff] %v376
      %s382 = smul.u32 4, %s19
      %p383 = scmp.lt.s32.totalorder %s18, 1
      %s384 = scalar_select %p383, %s18, 1
      %p385 = scmp.lt.s32.totalorder %s382, 3
      %s386 = scalar_select %p385, %s382, 3
      %s387 = smul.addr %s384, 4
      %s388 = sadd.s32 %s386, %s387
      %s389 = smul.addr %s388, 8
      %s390 = scalar_lea.vmem %s3, %s389
      // Predicated region
      $region33: #{outconv_forward.1} parent=31 // pred_check
        %p391 = pneg %p116
      $region34: #{outconv_forward.1} parent=31 // pred_check_branch
        %393 = sbr.rel (%p391) target = $region36
      $region35: #{outconv_forward.1} parent=31 // pred_region
        %s394 = smul.u32 4, %s19
      $region36: #{outconv_forward.1} parent=31 // pred_fallthru
        _
    $region32: #{outconv_forward.1} parent=5 // pred_fallthru
      _
    %p395 = scmp.le.s32.totalorder 2, %s9
    // Predicated region
    $region37: #{outconv_forward.1} parent=5 // pred_check
      %p396 = pneg %p395
    $region38: #{outconv_forward.1} parent=5 // pred_check_branch
      %398 = sbr.rel (%p396) target = $region40
    $region39: #{outconv_forward.1} parent=5 // pred_region
      %s399 = ssub.s32 %s9, 2
      // Predicated region
      $region41: #{outconv_forward.1} parent=39 // pred_check
        %p400 = pneg %p122
      $region42: #{outconv_forward.1} parent=39 // pred_check_branch
        %402 = sbr.rel (%p400) target = $region44
      $region43: #{outconv_forward.1} parent=39 // pred_region
        %s403 = smul.u32 4, %s21
        %p404 = scmp.lt.s32.totalorder %s20, 1
        %s405 = scalar_select %p404, %s20, 1
        %p406 = scmp.lt.s32.totalorder %s403, 3
        %s407 = scalar_select %p406, %s403, 3
        %s408 = smul.addr %s405, 4
        %s409 = sadd.s32 %s407, %s408
        %s410 = smul.addr %s409, 8
        %s411 = scalar_lea.vmem %s3, %s410
      $region44: #{outconv_forward.1} parent=39 // pred_fallthru
        _
    $region40: #{outconv_forward.1} parent=5 // pred_fallthru
      _
  $region6: #{outconv_forward.1} parent=0 // loop_footer
    %s13 = sadd.s32 1, %s9
  $region7: #{outconv_forward.1} parent=0 // loop_footer_branch
    %8 = sbr.rel target = $region3
  $region8: #{outconv_forward.1} parent=0 // loop_exit
    _

</llo_original>
